<compile_context>
chip_gen: v7x
topology: tpu7x:2x2x1
jax: 0.10.0
libtpu: 0.0.40
codegen_flags: <defaults>
</compile_context>

<pallas_src>
import math
from typing import NamedTuple

import jax
import jax.numpy as jnp
from jax import lax
from jax.experimental import pallas as pl
from jax.experimental.pallas import tpu as pltpu


# ----------------------------- kernels ------------------------------------


def _lora_kernel_fullk(x_ref, w_ref, b_ref, xa_ref, bl_ref, o_ref):
    # x_ref:  (tm, Kp)   activations (full K)
    # w_ref:  (tn, Kp)   base weight [out, in] tile (full K)
    # b_ref:  (1,  tn)   base bias tile (f32)
    # xa_ref: (tm, r)    precomputed x @ A^T
    # bl_ref: (tn, r)    scaling * lora_B weight [out, r] tile
    # o_ref:  (tm, tn)   output tile
    base = lax.dot_general(
        x_ref[...], w_ref[...], (((1,), (1,)), ((), ())),
        preferred_element_type=jnp.float32)
    lora = lax.dot_general(
        xa_ref[...], bl_ref[...], (((1,), (1,)), ((), ())),
        preferred_element_type=jnp.float32)
    o_ref[...] = (base + b_ref[...] + lora).astype(o_ref.dtype)


def _lora_kernel_ksplit(x_ref, w_ref, b_ref, xa_ref, bl_ref, o_ref, acc_ref):
    # Same as above but K is a reduction grid axis; acc_ref is (tm, tn) f32.
    k = pl.program_id(2)
    nk = pl.num_programs(2)

    part = lax.dot_general(
        x_ref[...], w_ref[...], (((1,), (1,)), ((), ())),
        preferred_element_type=jnp.float32)

    @pl.when(k == 0)
    def _():
        acc_ref[...] = part           # assign (no zero-init + RMW)

    @pl.when(k > 0)
    def _():
        acc_ref[...] += part

    @pl.when(k == nk - 1)
    def _():
        lora = lax.dot_general(
            xa_ref[...], bl_ref[...], (((1,), (1,)), ((), ())),
            preferred_element_type=jnp.float32)
        o_ref[...] = (acc_ref[...] + b_ref[...] + lora).astype(o_ref.dtype)


# --------------------------- planning helpers ------------------------------


def _round_up(x, m):
    return ((x + m - 1) // m) * m


def _default_vmem_limit_bytes():
    # Generation-aware scoped-VMEM limit: ~75% of physical, capped at 96 MiB.
    #   v7x  (64 MiB physical)  -> 48 MiB
    #   v5e/v6e (128 MiB)       -> 96 MiB
    cap = 64 * 1024 * 1024  # conservative fallback
    try:
        info = pltpu.get_tpu_info()
        cap = int(getattr(info, "vmem_capacity_bytes", cap))
    except Exception:
        pass
    return min((cap * 3) // 4, 96 * 1024 * 1024)


def _sublane(itemsize):
    # dtype-aware sublane alignment for the M tile.
    if itemsize >= 4:
        return 8
    if itemsize == 2:
        return 16
    return 32


class LoRAParams(NamedTuple):
    w: jax.Array          # [Np, Kp] padded base weight  (out, in)
    bias: jax.Array       # [1, Np]  padded base bias (f32)
    a: jax.Array          # [r, K]   lora_A weight (original, used for xa)
    b_scaled: jax.Array   # [Np, r]  scaling * lora_B weight (padded)
    N: int
    K: int
    Np: int
    Kp: int
    r: int
    tn: int
    tk: int
    reduce_k: bool
    tm_pref: int
    vmem_limit_bytes: int


def prepare_lora_params(w_base, b_base, a_lora, b_lora, scaling, *,
                        tm_pref=512, tn_pref=512, tk_pref=1024,
                        force_reduce_k=False, vmem_limit_bytes=None):
    """One-time parameter preparation (padding + scaling fold + tile plan).

    Do this at parameter-load time, NOT per forward call."""
    N, K = w_base.shape
    r = a_lora.shape[0]
    itemsize = jnp.dtype(w_base.dtype).itemsize
    sub = _sublane(itemsize)

    if vmem_limit_bytes is None:
        vmem_limit_bytes = _default_vmem_limit_bytes()
    budget = max(vmem_limit_bytes - (4 << 20), 8 << 20)

    tn = min(_round_up(tn_pref, 128), _round_up(N, 128))
    kp128 = _round_up(K, 128)
    r_pad = _round_up(r, 128)  # lane padding of the rank dim inside VMEM

    def footprint(tm, tn_, tk, with_acc):
        in_b = (tm * tk + tn_ * tk + tm * r_pad + tn_ * r_pad) * itemsize + tn_ * 4
        out_b = tm * tn_ * itemsize
        acc_b = tm * tn_ * 4 if with_acc else 0
        return 2 * (in_b + out_b) + acc_b   # double-buffered inputs/outputs

    tm_cap = max(_round_up(tm_pref, sub), sub)

    if (not force_reduce_k) and footprint(tm_cap, tn, kp128, False) <= budget:
        # Path A: full-K blocks, 2-D grid, no accumulator.
        reduce_k = False
        tk = kp128
    else:
        # Path B: K-reduction grid; shrink tk, then tn, then tm to fit.
        reduce_k = True
        tk = max(128, min(_round_up(tk_pref, 128), kp128))
        while footprint(tm_cap, tn, tk, True) > budget and tk > 128:
            tk = max(128, _round_up(tk // 2, 128))
        while footprint(tm_cap, tn, tk, True) > budget and tn > 128:
            tn = max(128, _round_up(tn // 2, 128))
        while footprint(tm_cap, tn, tk, True) > budget and tm_cap > sub:
            tm_cap = max(sub, tm_cap // 2)

    Np = _round_up(N, tn)
    Kp = kp128 if not reduce_k else _round_up(K, tk)

    w = w_base
    if (Np, Kp) != (N, K):
        w = jnp.pad(w, ((0, Np - N), (0, Kp - K)))

    bias = b_base.astype(jnp.float32).reshape(1, N)
    if Np != N:
        bias = jnp.pad(bias, ((0, 0), (0, Np - N)))

    b_scaled = b_lora * jnp.asarray(scaling, dtype=b_lora.dtype)
    if Np != N:
        b_scaled = jnp.pad(b_scaled, ((0, Np - N), (0, 0)))

    return LoRAParams(w=w, bias=bias, a=a_lora, b_scaled=b_scaled,
                      N=N, K=K, Np=Np, Kp=Kp, r=r, tn=tn, tk=tk,
                      reduce_k=reduce_k, tm_pref=tm_cap,
                      vmem_limit_bytes=int(vmem_limit_bytes))


# ------------------------------ forward ------------------------------------


def lora_linear(params: LoRAParams, x):
    """x: [..., in_dim] -> [..., out_dim]."""
    orig_shape = x.shape
    K = orig_shape[-1]
    assert K == params.K, "input feature dim mismatch"
    M = math.prod(orig_shape[:-1])
    dtype = x.dtype
    itemsize = jnp.dtype(dtype).itemsize
    sub = _sublane(itemsize)

    tm = min(params.tm_pref, _round_up(max(M, 1), sub))
    Mp = _round_up(M, tm)
    tn, tk, Np, Kp, r = params.tn, params.tk, params.Np, params.Kp, params.r

    x2d = x.reshape(M, K)
    # Rank-r A-path precomputed with plain XLA; scaling is already folded
    # into params.b_scaled at prepare time.
    xa = jnp.dot(x2d, params.a.T,
                 preferred_element_type=jnp.float32).astype(dtype)

    if (Mp, Kp) != (M, K):
        x2d = jnp.pad(x2d, ((0, Mp - M), (0, Kp - K)))
    if Mp != M:
        xa = jnp.pad(xa, ((0, Mp - M), (0, 0)))

    nmt = Mp // tm
    nnt = Np // tn

    flops = 2 * M * params.N * K + 2 * M * r * params.N
    bytes_accessed = ((Mp * Kp + Np * Kp + Mp * r + Np * r) * itemsize
                      + Np * 4 + Mp * Np * itemsize)
    cost = pl.CostEstimate(flops=flops, transcendentals=0,
                           bytes_accessed=bytes_accessed)

    if not params.reduce_k:
        # 2-D grid, N-tiles outermost so each W tile is DMA'd exactly once.
        grid = (nnt, nmt)
        in_specs = [
            pl.BlockSpec((tm, Kp), lambda j, i: (i, 0)),   # x
            pl.BlockSpec((tn, Kp), lambda j, i: (j, 0)),   # W  [out, in]
            pl.BlockSpec((1, tn),  lambda j, i: (0, j)),   # bias
            pl.BlockSpec((tm, r),  lambda j, i: (i, 0)),   # xa
            pl.BlockSpec((tn, r),  lambda j, i: (j, 0)),   # scaled B [out, r]
        ]
        out_specs = pl.BlockSpec((tm, tn), lambda j, i: (i, j))
        scratch = []
        kernel = _lora_kernel_fullk
        dims = ("parallel", "parallel")
    else:
        # 3-D grid with K reduction innermost; f32 accumulator scratch.
        grid = (nnt, nmt, Kp // tk)
        in_specs = [
            pl.BlockSpec((tm, tk), lambda j, i, k: (i, k)),   # x
            pl.BlockSpec((tn, tk), lambda j, i, k: (j, k)),   # W
            pl.BlockSpec((1, tn),  lambda j, i, k: (0, j)),   # bias
            pl.BlockSpec((tm, r),  lambda j, i, k: (i, 0)),   # xa
            pl.BlockSpec((tn, r),  lambda j, i, k: (j, 0)),   # scaled B
        ]
        out_specs = pl.BlockSpec((tm, tn), lambda j, i, k: (i, j))
        scratch = [pltpu.VMEM((tm, tn), jnp.float32)]
        kernel = _lora_kernel_ksplit
        dims = ("parallel", "parallel", "arbitrary")

    out = pl.pallas_call(
        kernel,
        out_shape=jax.ShapeDtypeStruct((Mp, Np), dtype),
        grid_spec=pltpu.PrefetchScalarGridSpec(
            num_scalar_prefetch=0,
            grid=grid,
            in_specs=in_specs,
            out_specs=out_specs,
            scratch_shapes=scratch,
        ),
        compiler_params=pltpu.CompilerParams(
            dimension_semantics=dims,
            vmem_limit_bytes=params.vmem_limit_bytes,
        ),
        cost_estimate=cost,
    )(x2d, params.w, params.bias, xa, params.b_scaled)

    if (Mp, Np) != (M, params.N):
        out = out[:M, :params.N]
    return out.reshape(*orig_shape[:-1], params.N)


# ------------------------------ test harness -------------------------------


def _kaiming_uniform(key, shape, a=math.sqrt(5)):
    # Matches torch.nn.init.kaiming_uniform_ for a 2-D weight (fan_in = shape[1]).
    fan_in = shape[1]
    gain = math.sqrt(2.0 / (1.0 + a * a))
    bound = gain * math.sqrt(3.0 / fan_in)
    return jax.random.uniform(key, shape, jnp.float32, -bound, bound)


def _reference(x, w_base, b_base, a_lora, b_lora, scaling):
    return x @ w_base.T + b_base + scaling * ((x @ a_lora.T) @ b_lora.T)


if __name__ == "__main__":
    key = jax.random.PRNGKey(0)
    k_x, k_w, k_b, k_a, k_lb = jax.random.split(key, 5)

    # ---- check 1: module-sized shapes, nonzero LoRA B so the scaled branch
    # is actually validated (module init zeros B, which would hide bugs).
    # Exercises the full-K 2-D path on a single-tile grid. ----
    batch, seq, in_dim, out_dim, r, alpha = 2, 8, 32, 32, 4, 8.0
    scaling = alpha / r

    w_bound = 1.0 / math.sqrt(in_dim)
    w_base = jax.random.uniform(k_w, (out_dim, in_dim), jnp.float32,
                                -w_bound, w_bound)
    b_base = jax.random.uniform(k_b, (out_dim,), jnp.float32,
                                -w_bound, w_bound)
    a_lora = _kaiming_uniform(k_a, (r, in_dim))
    b_lora = 0.05 * jax.random.normal(k_lb, (out_dim, r), jnp.float32)
    x = jax.random.normal(k_x, (batch, seq, in_dim), jnp.float32)

    params = prepare_lora_params(w_base, b_base, a_lora, b_lora, scaling)
    y = jax.block_until_ready(lora_linear(params, x))
    ref = _reference(x, w_base, b_base, a_lora, b_lora, scaling)
    assert y.shape == (batch, seq, out_dim)
    assert jnp.allclose(y, ref, atol=1e-5, rtol=1e-5), \
        float(jnp.max(jnp.abs(y - ref)))

    # ---- check 2: force the K-reduction path on a multi-tile (j, i, k) grid
    # so the accumulator assign/accumulate/finalize branches are exercised. ----
    k2 = jax.random.split(jax.random.PRNGKey(1), 5)
    batch2, seq2, in2, out2, r2, alpha2 = 2, 16, 256, 256, 4, 16.0
    scaling2 = alpha2 / r2
    w2 = jax.random.uniform(k2[0], (out2, in2), jnp.float32, -0.05, 0.05)
    bb2 = jax.random.uniform(k2[1], (out2,), jnp.float32, -0.05, 0.05)
    a2 = _kaiming_uniform(k2[2], (r2, in2))
    lb2 = 0.05 * jax.random.normal(k2[3], (out2, r2), jnp.float32)
    x2 = jax.random.normal(k2[4], (batch2, seq2, in2), jnp.float32)

    params2 = prepare_lora_params(w2, bb2, a2, lb2, scaling2,
                                  tm_pref=8, tn_pref=128, tk_pref=128,
                                  force_reduce_k=True)   # grid (2, 4, 2)
    y2 = jax.block_until_ready(lora_linear(params2, x2))
    ref2 = _reference(x2, w2, bb2, a2, lb2, scaling2)
    assert y2.shape == (batch2, seq2, out2)
    assert jnp.allclose(y2, ref2, atol=1e-4, rtol=1e-4), \
        float(jnp.max(jnp.abs(y2 - ref2)))

    # ---- check 3: full-K path on a multi-tile (j, i) grid (N outer, M inner)
    # so the W-streamed-once ordering and output slicing are exercised. ----
    k3 = jax.random.split(jax.random.PRNGKey(2), 5)
    batch3, seq3, in3, out3, r3, alpha3 = 4, 48, 64, 256, 8, 16.0
    scaling3 = alpha3 / r3
    w3 = jax.random.uniform(k3[0], (out3, in3), jnp.float32, -0.05, 0.05)
    bb3 = jax.random.uniform(k3[1], (out3,), jnp.float32, -0.05, 0.05)
    a3 = _kaiming_uniform(k3[2], (r3, in3))
    lb3 = 0.05 * jax.random.normal(k3[3], (out3, r3), jnp.float32)
    x3 = jax.random.normal(k3[4], (batch3, seq3, in3), jnp.float32)

    params3 = prepare_lora_params(w3, bb3, a3, lb3, scaling3,
                                  tm_pref=64, tn_pref=128)  # grid (2, 3)
    y3 = jax.block_until_ready(lora_linear(params3, x3))
    ref3 = _reference(x3, w3, bb3, a3, lb3, scaling3)
    assert y3.shape == (batch3, seq3, out3)
    assert jnp.allclose(y3, ref3, atol=1e-4, rtol=1e-4), \
        float(jnp.max(jnp.abs(y3 - ref3)))

    print("KERNEL_OK")
</pallas_src>

<mosaic_0001>
module attributes {stable_mosaic.version = 11 : i64} {
  func.func @_lora_kernel_fullk(%arg0: i32, %arg1: i32, %arg2: memref<16x128xf32, #tpu.memory_space<vmem>>, %arg3: memref<128x128xf32, #tpu.memory_space<vmem>>, %arg4: memref<1x128xf32, #tpu.memory_space<vmem>>, %arg5: memref<16x4xf32, #tpu.memory_space<vmem>>, %arg6: memref<128x4xf32, #tpu.memory_space<vmem>>, %arg7: memref<16x128xf32, #tpu.memory_space<vmem>>) attributes {dimension_semantics = [#tpu.dimension_semantics<parallel>, #tpu.dimension_semantics<parallel>], iteration_bounds = array<i64: 1, 1>, scalar_prefetch = 0 : i64, scratch_operands = 0 : i64, tpu.core_type = #tpu.core_type<tc>, window_params = [{transform_indices = @transform_0, window_bounds = array<i64: 16, 128>}, {transform_indices = @transform_1, window_bounds = array<i64: 128, 128>}, {transform_indices = @transform_2, window_bounds = array<i64: 1, 128>}, {transform_indices = @transform_3, window_bounds = array<i64: 16, 4>}, {transform_indices = @transform_4, window_bounds = array<i64: 128, 4>}, {transform_indices = @transform_5, window_bounds = array<i64: 16, 128>}]} {
    %c0 = arith.constant 0 : index
    %c0_0 = arith.constant 0 : index
    %0 = vector.load %arg2[%c0, %c0_0] : memref<16x128xf32, #tpu.memory_space<vmem>>, vector<16x128xf32>
    %c0_1 = arith.constant 0 : index
    %c0_2 = arith.constant 0 : index
    %1 = vector.load %arg3[%c0_1, %c0_2] : memref<128x128xf32, #tpu.memory_space<vmem>>, vector<128x128xf32>
    %cst = arith.constant dense<0.000000e+00> : vector<16x128xf32>
    %2 = tpu.matmul %0, %1, %cst {dimension_numbers = #tpu.dot_dimension_numbers<[1], [1], [0], [0], [0, 0, 1, 0], [], []>} : vector<16x128xf32>, vector<128x128xf32>, vector<16x128xf32> -> vector<16x128xf32>
    %c0_3 = arith.constant 0 : index
    %c0_4 = arith.constant 0 : index
    %3 = vector.load %arg5[%c0_3, %c0_4] : memref<16x4xf32, #tpu.memory_space<vmem>>, vector<16x4xf32>
    %c0_5 = arith.constant 0 : index
    %c0_6 = arith.constant 0 : index
    %4 = vector.load %arg6[%c0_5, %c0_6] : memref<128x4xf32, #tpu.memory_space<vmem>>, vector<128x4xf32>
    %cst_7 = arith.constant dense<0.000000e+00> : vector<16x128xf32>
    %5 = tpu.matmul %3, %4, %cst_7 {dimension_numbers = #tpu.dot_dimension_numbers<[1], [1], [0], [0], [0, 0, 1, 0], [], []>} : vector<16x4xf32>, vector<128x4xf32>, vector<16x128xf32> -> vector<16x128xf32>
    %c0_8 = arith.constant 0 : index
    %c0_9 = arith.constant 0 : index
    %6 = vector.load %arg4[%c0_8, %c0_9] : memref<1x128xf32, #tpu.memory_space<vmem>>, vector<1x128xf32>
    %7 = vector.broadcast %6 : vector<1x128xf32> to vector<16x128xf32>
    %8 = arith.addf %2, %7 : vector<16x128xf32>
    %9 = arith.addf %8, %5 : vector<16x128xf32>
    %c0_10 = arith.constant 0 : index
    %c0_11 = arith.constant 0 : index
    %10 = vector.load %arg7[%c0_10, %c0_11] : memref<16x128xf32, #tpu.memory_space<vmem>>, vector<16x128xf32>
    tpu.vector_store %arg7[%c0_10, %c0_11], %9 {strides = array<i32>} : memref<16x128xf32, #tpu.memory_space<vmem>>, vector<16x128xf32>,
    return
  }
  func.func @transform_0(%arg0: i32, %arg1: i32) -> (i32, i32) {
    %c0_i32 = arith.constant 0 : i32
    %c0_i32_0 = arith.constant 0 : i32
    return %arg1, %c0_i32 : i32, i32
  }
  func.func @transform_1(%arg0: i32, %arg1: i32) -> (i32, i32) {
    %c0_i32 = arith.constant 0 : i32
    %c0_i32_0 = arith.constant 0 : i32
    return %arg0, %c0_i32 : i32, i32
  }
  func.func @transform_2(%arg0: i32, %arg1: i32) -> (i32, i32) {
    %c0_i32 = arith.constant 0 : i32
    %c0_i32_0 = arith.constant 0 : i32
    return %c0_i32, %arg0 : i32, i32
  }
  func.func @transform_3(%arg0: i32, %arg1: i32) -> (i32, i32) {
    %c0_i32 = arith.constant 0 : i32
    %c0_i32_0 = arith.constant 0 : i32
    return %arg1, %c0_i32 : i32, i32
  }
  func.func @transform_4(%arg0: i32, %arg1: i32) -> (i32, i32) {
    %c0_i32 = arith.constant 0 : i32
    %c0_i32_0 = arith.constant 0 : i32
    return %arg0, %c0_i32 : i32, i32
  }
  func.func @transform_5(%arg0: i32, %arg1: i32) -> (i32, i32) {
    %c0_i32 = arith.constant 0 : i32
    return %arg1, %arg0 : i32, i32
  }
}

</mosaic_0001>

<llo_original>
// kernel: tpu_custom_call.1
$region0: #{tpu_custom_call.1}
  #allocation0 [shape = 'u32[]', space=smem, size = 0x4, offset = 0x4, fixed_abs, tag = 'smem constant byte address 0x4 - core index']
  #allocation1 [shape = 'u32[144,128]{1,0:T(1,128)}', space=vmem, size = 0x12000, scoped, tag = 'internal scratch']
  %s0 = inlined_call_operand.vmem [shape: f32[16,128], index: 0, kind: input, shape index: {}]
  %s1 = inlined_call_operand.vmem [shape: f32[128,128], index: 1, kind: input, shape index: {}]
  %s2 = inlined_call_operand.vmem [shape: f32[1,128], index: 2, kind: input, shape index: {}]
  %s3 = inlined_call_operand.vmem [shape: f32[16,4], index: 3, kind: input, shape index: {}]
  %s4 = inlined_call_operand.vmem [shape: f32[128,4], index: 4, kind: input, shape index: {}]
  %s5 = inlined_call_operand.hbm [shape: f32[16,128], index: 5, kind: output, shape index: {}]
  %s6 = sld [smem:[#allocation0]]
  $region30: #{tpu_custom_call.1} parent=0
    _
  %s8 = ssub.s32 1, %s6
  %s9 = scalar_select 0, %s8, %s6
  $region1: #{tpu_custom_call.1} parent=0
    #allocation2 [shape = 'u8[8192]{0}', space=vmem, size = 0x2000, scoped, tag = 'output window, operand 0, single buffered']
    #allocation3 [shape = 's32[1]{0}', space=sflag, size = 0x4, scoped, tag = 'scoped memory for tpu_custom_call.1']
    %10 = vsyncpa [#allocation3], 0
    // Predicated region
    $region2: #{tpu_custom_call.1} parent=1 // pred_check
      _
    $region3: #{tpu_custom_call.1} parent=1 // pred_check_branch
      %12 = sbr.rel (0) target = $region5
    $region4: #{tpu_custom_call.1} parent=1 // pred_region
      _
    $region5: #{tpu_custom_call.1} parent=1 // pred_fallthru
      _
    // Predicated region
    $region6: #{tpu_custom_call.1} parent=1 // pred_check
      _
    $region7: #{tpu_custom_call.1} parent=1 // pred_check_branch
      %14 = sbr.rel (0) target = $region9
    $region8: #{tpu_custom_call.1} parent=1 // pred_region
      _
    $region9: #{tpu_custom_call.1} parent=1 // pred_fallthru
      _
    // Predicated region
    $region10: #{tpu_custom_call.1} parent=1 // pred_check
      _
    $region11: #{tpu_custom_call.1} parent=1 // pred_check_branch
      %16 = sbr.rel (0) target = $region13
    $region12: #{tpu_custom_call.1} parent=1 // pred_region
      _
    $region13: #{tpu_custom_call.1} parent=1 // pred_fallthru
      _
    // Predicated region
    $region14: #{tpu_custom_call.1} parent=1 // pred_check
      _
    $region15: #{tpu_custom_call.1} parent=1 // pred_check_branch
      %18 = sbr.rel (0) target = $region17
    $region16: #{tpu_custom_call.1} parent=1 // pred_region
      _
    $region17: #{tpu_custom_call.1} parent=1 // pred_fallthru
      _
    // Predicated region
    $region18: #{tpu_custom_call.1} parent=1 // pred_check
      _
    $region19: #{tpu_custom_call.1} parent=1 // pred_check_branch
      %20 = sbr.rel (0) target = $region21
    $region20: #{tpu_custom_call.1} parent=1 // pred_region
      _
    $region21: #{tpu_custom_call.1} parent=1 // pred_fallthru
      _
    %v21 = vld [vmem:[%s0] sm:$0xff]
    %v22 = vld [vmem:[%s0 + $0x8] sm:$0xff]
    %v23 = vld [vmem:[%s1] sm:$0xff]
    %v24 = vld [vmem:[%s1 + $0x8] sm:$0xff]
    %v25 = vld [vmem:[%s1 + $0x10] sm:$0xff]
    %v26 = vld [vmem:[%s1 + $0x18] sm:$0xff]
    %v27 = vld [vmem:[%s1 + $0x20] sm:$0xff]
    %v28 = vld [vmem:[%s1 + $0x28] sm:$0xff]
    %v29 = vld [vmem:[%s1 + $0x30] sm:$0xff]
    %v30 = vld [vmem:[%s1 + $0x38] sm:$0xff]
    %v31 = vld [vmem:[%s1 + $0x40] sm:$0xff]
    %v32 = vld [vmem:[%s1 + $0x48] sm:$0xff]
    %v33 = vld [vmem:[%s1 + $0x50] sm:$0xff]
    %v34 = vld [vmem:[%s1 + $0x58] sm:$0xff]
    %v35 = vld [vmem:[%s1 + $0x60] sm:$0xff]
    %v36 = vld [vmem:[%s1 + $0x68] sm:$0xff]
    %v37 = vld [vmem:[%s1 + $0x70] sm:$0xff]
    %v38 = vld [vmem:[%s1 + $0x78] sm:$0xff]
    %v39 = vld [vmem:[%s3] sm:$0xff]
    %v40 = vld [vmem:[%s3 + $0x8] sm:$0xff]
    %v41 = vld [vmem:[%s4] sm:$0xff]
    %v42 = vld [vmem:[%s4 + $0x8] sm:$0xff]
    %v43 = vld [vmem:[%s4 + $0x10] sm:$0xff]
    %v44 = vld [vmem:[%s4 + $0x18] sm:$0xff]
    %v45 = vld [vmem:[%s4 + $0x20] sm:$0xff]
    %v46 = vld [vmem:[%s4 + $0x28] sm:$0xff]
    %v47 = vld [vmem:[%s4 + $0x30] sm:$0xff]
    %v48 = vld [vmem:[%s4 + $0x38] sm:$0xff]
    %v49 = vld [vmem:[%s4 + $0x40] sm:$0xff]
    %v50 = vld [vmem:[%s4 + $0x48] sm:$0xff]
    %v51 = vld [vmem:[%s4 + $0x50] sm:$0xff]
    %v52 = vld [vmem:[%s4 + $0x58] sm:$0xff]
    %v53 = vld [vmem:[%s4 + $0x60] sm:$0xff]
    %v54 = vld [vmem:[%s4 + $0x68] sm:$0xff]
    %v55 = vld [vmem:[%s4 + $0x70] sm:$0xff]
    %v56 = vld [vmem:[%s4 + $0x78] sm:$0xff]
    %vm57 = vcmask 31744
    %v59 = vsel %vm57, %v39, 0
    %v62 = vsel %vm57, %v40, 0
    %v65 = vsel %vm57, %v41, 0
    %v68 = vsel %vm57, %v42, 0
    %v71 = vsel %vm57, %v43, 0
    %v74 = vsel %vm57, %v44, 0
    %v77 = vsel %vm57, %v45, 0
    %v80 = vsel %vm57, %v46, 0
    %v83 = vsel %vm57, %v47, 0
    %v86 = vsel %vm57, %v48, 0
    %v89 = vsel %vm57, %v49, 0
    %v92 = vsel %vm57, %v50, 0
    %v95 = vsel %vm57, %v51, 0
    %v98 = vsel %vm57, %v52, 0
    %v101 = vsel %vm57, %v53, 0
    %v104 = vsel %vm57, %v54, 0
    %v107 = vsel %vm57, %v55, 0
    %v110 = vsel %vm57, %v56, 0
    %112 = vmatprep.subr.mxu0 0.0
    %113 = vmatpush1.xpose.msra.mxu0 %v65
    %114 = vmatprep.subr.mxu0 0.0
    %115 = vmatpush1.xpose.msra.mxu0 %v68
    %116 = vmatprep.subr.mxu0 0.0
    %117 = vmatpush1.xpose.msra.mxu0 %v71
    %118 = vmatprep.subr.mxu0 0.0
    %119 = vmatpush1.xpose.msra.mxu0 %v74
    %120 = vmatprep.subr.mxu0 0.0
    %121 = vmatpush1.xpose.msra.mxu0 %v77
    %122 = vmatprep.subr.mxu0 0.0
    %123 = vmatpush1.xpose.msra.mxu0 %v80
    %124 = vmatprep.subr.mxu0 0.0
    %125 = vmatpush1.xpose.msra.mxu0 %v83
    %126 = vmatprep.subr.mxu0 0.0
    %127 = vmatpush1.xpose.msra.mxu0 %v86
    %128 = vmatprep.subr.mxu0 0.0
    %129 = vmatpush1.xpose.msra.mxu0 %v89
    %130 = vmatprep.subr.mxu0 0.0
    %131 = vmatpush1.xpose.msra.mxu0 %v92
    %132 = vmatprep.subr.mxu0 0.0
    %133 = vmatpush1.xpose.msra.mxu0 %v95
    %134 = vmatprep.subr.mxu0 0.0
    %135 = vmatpush1.xpose.msra.mxu0 %v98
    %136 = vmatprep.subr.mxu0 0.0
    %137 = vmatpush1.xpose.msra.mxu0 %v101
    %138 = vmatprep.subr.mxu0 0.0
    %139 = vmatpush1.xpose.msra.mxu0 %v104
    %140 = vmatprep.subr.mxu0 0.0
    %141 = vmatpush1.xpose.msra.mxu0 %v107
    %142 = vmatprep.subr.mxu0 0.0
    %143 = vmatpush1.xpose.msra.mxu0 %v110
    %144 = vmatprep.subr.mxu0 0.0
    %145 = vmatpush1.xpose.msra.mxu0 0.0
    %146 = vmatprep.subr.mxu0 0.0
    %147 = vmatpush1.xpose.msra.mxu0 0.0
    %148 = vmatprep.subr.mxu0 0.0
    %149 = vmatpush1.xpose.msra.mxu0 0.0
    %150 = vmatprep.subr.mxu0 0.0
    %151 = vmatpush1.xpose.msra.mxu0 0.0
    %152 = vmatprep.subr.mxu0 0.0
    %153 = vmatpush1.xpose.msra.mxu0 0.0
    %154 = vmatprep.subr.mxu0 0.0
    %155 = vmatpush1.xpose.msra.mxu0 0.0
    %156 = vmatprep.subr.mxu0 0.0
    %157 = vmatpush1.xpose.msra.mxu0 0.0
    %158 = vmatprep.subr.mxu0 0.0
    %159 = vmatpush1.xpose.msra.mxu0 0.0
    %160 = vmatprep.subr.mxu0 0.0
    %161 = vmatpush1.xpose.msra.mxu0 0.0
    %162 = vmatprep.subr.mxu0 0.0
    %163 = vmatpush1.xpose.msra.mxu0 0.0
    %164 = vmatprep.subr.mxu0 0.0
    %165 = vmatpush1.xpose.msra.mxu0 0.0
    %166 = vmatprep.subr.mxu0 0.0
    %167 = vmatpush1.xpose.msra.mxu0 0.0
    %168 = vmatprep.subr.mxu0 0.0
    %169 = vmatpush1.xpose.msra.mxu0 0.0
    %170 = vmatprep.subr.mxu0 0.0
    %171 = vmatpush1.xpose.msra.mxu0 0.0
    %172 = vmatprep.subr.mxu0 0.0
    %173 = vmatpush1.xpose.msra.mxu0 0.0
    %174 = vmatprep.subr.mxu0 0.0
    %175 = vmatpush1.xpose.msra.mxu0 0.0
    %176 = vmatprep.mubr.f32.mxu0 0.0
    %177 = vmatmul.mubr.f32.gmra.mrb[0].mxu0 %v59
    %v178 = vpop.f32.mrb[0].mxu0
    %v179 = vadd.f32 0.0, %v178
    %v180 = vpop.f32.mrb[0].mxu0
    %181 = vmatprep.mubr.f32.mxu0 0.0
    %182 = vmatmul.mubr.f32.gmra.mrb[0].mxu0 %v62
    %v183 = vpop.f32.mrb[0].mxu0
    %v184 = vadd.f32 0.0, %v183
    %v185 = vpop.f32.mrb[0].mxu0
    %186 = vdwg.mxu0
    %v187 = vld [vmem:[%s2] sm:$0x1]
    %v189 = vlaneseq
    %v190 = vshrl.u32 %v189, 7
    %v191 = vsub.s32 0, %v190
    %v192 = vrot.slane %v187, %v191
    %194 = vmatprep.subr.mxu0 0.0
    %195 = vmatpush1.xpose.msra.mxu0 %v23
    %196 = vmatprep.subr.mxu0 0.0
    %197 = vmatpush1.xpose.msra.mxu0 %v24
    %198 = vmatprep.subr.mxu0 0.0
    %199 = vmatpush1.xpose.msra.mxu0 %v25
    %200 = vmatprep.subr.mxu0 0.0
    %201 = vmatpush1.xpose.msra.mxu0 %v26
    %202 = vmatprep.subr.mxu0 0.0
    %203 = vmatpush1.xpose.msra.mxu0 %v27
    %204 = vmatprep.subr.mxu0 0.0
    %205 = vmatpush1.xpose.msra.mxu0 %v28
    %206 = vmatprep.subr.mxu0 0.0
    %207 = vmatpush1.xpose.msra.mxu0 %v29
    %208 = vmatprep.subr.mxu0 0.0
    %209 = vmatpush1.xpose.msra.mxu0 %v30
    %210 = vmatprep.subr.mxu0 0.0
    %211 = vmatpush1.xpose.msra.mxu0 %v31
    %212 = vmatprep.subr.mxu0 0.0
    %213 = vmatpush1.xpose.msra.mxu0 %v32
    %214 = vmatprep.subr.mxu0 0.0
    %215 = vmatpush1.xpose.msra.mxu0 %v33
    %216 = vmatprep.subr.mxu0 0.0
    %217 = vmatpush1.xpose.msra.mxu0 %v34
    %218 = vmatprep.subr.mxu0 0.0
    %219 = vmatpush1.xpose.msra.mxu0 %v35
    %220 = vmatprep.subr.mxu0 0.0
    %221 = vmatpush1.xpose.msra.mxu0 %v36
    %222 = vmatprep.subr.mxu0 0.0
    %223 = vmatpush1.xpose.msra.mxu0 %v37
    %224 = vmatprep.subr.mxu0 0.0
    %225 = vmatpush1.xpose.msra.mxu0 %v38
    %226 = vmatprep.subr.mxu0 0.0
    %227 = vmatpush1.xpose.msra.mxu0 0.0
    %228 = vmatprep.subr.mxu0 0.0
    %229 = vmatpush1.xpose.msra.mxu0 0.0
    %230 = vmatprep.subr.mxu0 0.0
    %231 = vmatpush1.xpose.msra.mxu0 0.0
    %232 = vmatprep.subr.mxu0 0.0
    %233 = vmatpush1.xpose.msra.mxu0 0.0
    %234 = vmatprep.subr.mxu0 0.0
    %235 = vmatpush1.xpose.msra.mxu0 0.0
    %236 = vmatprep.subr.mxu0 0.0
    %237 = vmatpush1.xpose.msra.mxu0 0.0
    %238 = vmatprep.subr.mxu0 0.0
    %239 = vmatpush1.xpose.msra.mxu0 0.0
    %240 = vmatprep.subr.mxu0 0.0
    %241 = vmatpush1.xpose.msra.mxu0 0.0
    %242 = vmatprep.subr.mxu0 0.0
    %243 = vmatpush1.xpose.msra.mxu0 0.0
    %244 = vmatprep.subr.mxu0 0.0
    %245 = vmatpush1.xpose.msra.mxu0 0.0
    %246 = vmatprep.subr.mxu0 0.0
    %247 = vmatpush1.xpose.msra.mxu0 0.0
    %248 = vmatprep.subr.mxu0 0.0
    %249 = vmatpush1.xpose.msra.mxu0 0.0
    %250 = vmatprep.subr.mxu0 0.0
    %251 = vmatpush1.xpose.msra.mxu0 0.0
    %252 = vmatprep.subr.mxu0 0.0
    %253 = vmatpush1.xpose.msra.mxu0 0.0
    %254 = vmatprep.subr.mxu0 0.0
    %255 = vmatpush1.xpose.msra.mxu0 0.0
    %256 = vmatprep.subr.mxu0 0.0
    %257 = vmatpush1.xpose.msra.mxu0 0.0
    %258 = vmatprep.mubr.f32.mxu0 0.0
    %259 = vmatmul.mubr.f32.gmra.mrb[0].mxu0 %v21
    %v260 = vpop.f32.mrb[0].mxu0
    %v261 = vadd.f32 %v192, %v260
    %v262 = vpop.f32.mrb[0].mxu0
    %263 = vmatprep.mubr.f32.mxu0 0.0
    %264 = vmatmul.mubr.f32.gmra.mrb[0].mxu0 %v22
    %v265 = vpop.f32.mrb[0].mxu0
    %v266 = vadd.f32 %v192, %v265
    %v267 = vpop.f32.mrb[0].mxu0
    %268 = vdwg.mxu0
    %v269 = vadd.f32 %v261, %v179
    %v270 = vadd.f32 %v266, %v184
    %271 = vst [vmem:[#allocation2] sm:$0xff] %v269
    %272 = vst [vmem:[#allocation2 + $0x8] sm:$0xff] %v270
    // Predicated region
    $region22: #{tpu_custom_call.1} parent=1 // pred_check
      _
    $region23: #{tpu_custom_call.1} parent=1 // pred_check_branch
      %274 = sbr.rel (0) target = $region25
    $region24: #{tpu_custom_call.1} parent=1 // pred_region
      %s276 = ssub.s32 256, 256
      %277 = vsyncadd [#allocation3], %s276
      %s278 = sshll.u32 [#allocation2], 4
      %s279 = int_to_ptr.vmem [resolvable:$true] %s278
      %284 = dma.vmem_to_hbm [thread:$0]  %s279, 256, %s5, [#allocation3], 128, 128, 8
    $region25: #{tpu_custom_call.1} parent=1 // pred_fallthru
      _
    // Predicated region
    $region26: #{tpu_custom_call.1} parent=1 // pred_check
      _
    $region27: #{tpu_custom_call.1} parent=1 // pred_check_branch
      %286 = sbr.rel (0) target = $region29
    $region28: #{tpu_custom_call.1} parent=1 // pred_region
      %287 = dma.done [#allocation3], 256
    $region29: #{tpu_custom_call.1} parent=1 // pred_fallthru
      _
    %288 = vsyncpa [#allocation3], 1

</llo_original>
